<compile_context>
chip_gen: v7x
topology: tpu7x:2x2x1
jax: 0.10.0
libtpu: 0.0.40
codegen_flags: <defaults>
</compile_context>

<pallas_src>
import jax
import jax.numpy as jnp
from jax import lax
from jax.experimental import pallas as pl
from jax.experimental.pallas import tpu as pltpu


def _proj_kernel(x_ref, w_ref, b_ref, o_ref):
    # x_ref: (t_b, C_in, t_hw)  channel-major pixel tile straight out of NCHW
    # w_ref: (C_in, C_out)      1x1-conv weight, pre-transposed (stationary RHS)
    # b_ref: (1, C_out)         bias
    # o_ref: (t_b, t_hw, C_out) output row tile (pixels x channels)
    w = w_ref[...].astype(jnp.float32)          # tiny, grid-resident
    bias = b_ref[...].astype(jnp.float32)       # (1, C_out), broadcasts over rows
    for bb in range(x_ref.shape[0]):            # static, small unrolled batch slab
        x = x_ref[bb].astype(jnp.float32)       # (C_in, t_hw); f32 upcast happens
        # in VMEM (not in HBM) and keeps the dot f32xf32 so it also runs on the
        # interpret/CPU path.  Contract C_in (lhs dim 0 vs rhs dim 0) so the
        # result is (t_hw, C_out) directly -- no f32 accumulator transpose.
        acc = lax.dot_general(
            x, w,
            dimension_numbers=(((0,), (0,)), ((), ())),
            preferred_element_type=jnp.float32,
        )                                       # (t_hw, C_out)
        o_ref[bb] = (acc + bias).astype(o_ref.dtype)


def image_bert_encoder(x_nchw, conv_weight, conv_bias, *, t_hw=2048, t_b=None,
                       out_dtype=None):
    """x_nchw: (B, C_in, H, W); conv_weight: (C_out, C_in, 1, 1); conv_bias: (C_out,).
    Returns (B, H*W, C_out), matching the PyTorch module's output.

    out_dtype: pass jnp.bfloat16 to halve output HBM store traffic when the
    downstream consumer accepts it (default keeps x's dtype / exact semantics)."""
    B, Cin, H, W = x_nchw.shape
    Cout = conv_weight.shape[0]
    HW = H * W
    if out_dtype is None:
        out_dtype = x_nchw.dtype

    # Free reshapes only -- no NCHW->NHWC transpose of x in HBM and NO wrapper
    # dtype cast (either would add a full extra HBM pass over x).  Only the
    # tiny grid-invariant weight is transposed once so the MXU sees a
    # canonical (K, N) stationary RHS.
    x3d = x_nchw.reshape(B, Cin, HW)                  # (B, C_in, HW)
    w2d = conv_weight.reshape(Cout, Cin).T            # (C_in, C_out), tiny one-off
    b2d = conv_bias.reshape(1, Cout)

    x_bytes = jax.dtypes.canonicalize_dtype(x3d.dtype).itemsize
    w_bytes = jax.dtypes.canonicalize_dtype(w2d.dtype).itemsize
    b_bytes = jax.dtypes.canonicalize_dtype(b2d.dtype).itemsize
    o_bytes = jax.dtypes.canonicalize_dtype(out_dtype).itemsize

    on_tpu = any(d.platform == "tpu" for d in jax.devices())
    try:
        vmem_cap = int(getattr(pltpu.get_tpu_info(), "vmem_capacity_bytes", 64 << 20))
    except Exception:
        vmem_cap = 64 << 20                           # assume the smallest (v7x)
    budget = vmem_cap * 3 // 4                        # headroom for internal scratch

    # --- tile selection ----------------------------------------------------
    t_hw_req = int(t_hw)
    # Pixel tile: multiple of 128 (lane dim) or the full H*W extent.
    t_hw = min(t_hw_req, HW)
    if t_hw < HW:
        t_hw = max(128, (t_hw // 128) * 128)

    # Small-HW (ViT-style) inputs: one pixel tile already covers all of H*W, so
    # block several batch items per grid step to amortize per-step overhead.
    if t_b is None:
        if t_hw == HW:
            t_b = max(1, min(B, t_hw_req // max(HW, 1)))
            while B % t_b:
                t_b -= 1
        else:
            t_b = 1

    def _halve_hw(t):
        return max(128, (t // 2 // 128) * 128) if t > 128 else t

    w_bufs = 1 if on_tpu else 2   # weight/bias single-buffered on hardware

    def _vmem_need(tb, thw):
        x_tile = tb * Cin * thw * x_bytes
        o_tile = tb * thw * Cout * o_bytes
        w_res = w_bufs * (Cin * Cout * w_bytes + Cout * b_bytes)
        # compiler-materialized f32 temporaries (in-kernel casts + dot results),
        # conservatively assuming the unrolled batch slab keeps them all live.
        f32_tmp = tb * (Cin * thw + thw * Cout) * 4 + Cin * Cout * 4 + Cout * 4
        return 2 * x_tile + 2 * o_tile + w_res + f32_tmp

    # v7x has 2 TensorCores per chip: keep at least 2 parallel grid programs.
    while pl.cdiv(B, t_b) * pl.cdiv(HW, t_hw) < 2:
        if t_b > 1:
            t_b = max(1, t_b // 2)
            while B % t_b:
                t_b -= 1
        else:
            new = _halve_hw(t_hw)
            if new == t_hw:
                break
            t_hw = new

    # Shrink tiles until the double-buffered working set fits the VMEM budget.
    while _vmem_need(t_b, t_hw) > budget:
        new = _halve_hw(t_hw)
        if new != t_hw:
            t_hw = new
            continue
        if t_b > 1:
            t_b = max(1, t_b // 2)
            while B % t_b:
                t_b -= 1
            continue
        break

    vmem_limit = int(min(max(_vmem_need(t_b, t_hw) + (4 << 20), 32 << 20), budget))
    grid = (pl.cdiv(B, t_b), pl.cdiv(HW, t_hw))

    # Grid-invariant weight/bias: never re-DMA'd, so single-buffer them on real
    # hardware (skipped on the interpret path, where it is a no-op anyway).
    resident = {"pipeline_mode": pl.Buffered(1)} if on_tpu else {}

    # NOTE: lane-dense output is the biggest store-side lever -- confirm
    # hidden_size (C_out) % 128 == 0 in production; the demo's C_out=32 uses
    # masked partial stores.
    out = pl.pallas_call(
        _proj_kernel,
        out_shape=jax.ShapeDtypeStruct((B, HW, Cout), out_dtype),
        grid_spec=pltpu.PrefetchScalarGridSpec(
            num_scalar_prefetch=0,
            grid=grid,
            in_specs=[
                # channel-major pixel tile, possibly spanning several batch items
                pl.BlockSpec((t_b, Cin, t_hw), lambda b, i: (b, 0, i)),
                # grid-invariant weight / bias, resident across the whole grid
                pl.BlockSpec((Cin, Cout), lambda b, i: (0, 0), **resident),
                pl.BlockSpec((1, Cout), lambda b, i: (0, 0), **resident),
            ],
            out_specs=pl.BlockSpec((t_b, t_hw, Cout), lambda b, i: (b, i, 0)),
        ),
        compiler_params=pltpu.CompilerParams(
            dimension_semantics=("parallel", "parallel"),
            vmem_limit_bytes=vmem_limit,
        ),
    )(x3d, w2d, b2d)

    return out  # (B, H*W, C_out)


if __name__ == "__main__":
    # Config implied by the module: image_hidden_size (conv in-channels),
    # hidden_size (conv out-channels). Small deterministic shapes.
    B, C_in, H, W = 2, 4, 16, 16          # x: (2, 4, 16, 16) NCHW
    hidden_size = 32

    key = jax.random.PRNGKey(0)
    kx, kw, kb = jax.random.split(key, 3)

    x = jax.random.normal(kx, (B, C_in, H, W), dtype=jnp.float32)
    conv_weight = 0.1 * jax.random.normal(kw, (hidden_size, C_in, 1, 1), dtype=jnp.float32)
    conv_bias = 0.1 * jax.random.normal(kb, (hidden_size,), dtype=jnp.float32)

    # Reference in plain JAX (1x1 conv == channel matmul), same output layout.
    ref = jnp.einsum("bchw,oc->bhwo", x, conv_weight.reshape(hidden_size, C_in))
    ref = (ref + conv_bias).reshape(B, H * W, hidden_size)

    # Exact-semantics path: native f32 in / f32 out, tight tolerance.
    out = jax.block_until_ready(image_bert_encoder(x, conv_weight, conv_bias))
    assert out.shape == (B, H * W, hidden_size)
    assert out.dtype == x.dtype
    assert jnp.allclose(out, ref, atol=1e-5, rtol=1e-5)

    # Reduced output store traffic (perf review): bf16 out, f32 accumulation.
    out_bf16 = jax.block_until_ready(
        image_bert_encoder(x, conv_weight, conv_bias, out_dtype=jnp.bfloat16))
    assert out_bf16.dtype == jnp.bfloat16
    assert jnp.allclose(out_bf16.astype(jnp.float32), ref, atol=3e-2, rtol=3e-2)

    # Upstream-supplied bf16 activations: streamed as bf16 (half the x-read
    # bytes), upcast in-kernel right before the f32 MXU dot.
    out_bf_in = jax.block_until_ready(
        image_bert_encoder(x.astype(jnp.bfloat16), conv_weight, conv_bias,
                           out_dtype=jnp.bfloat16))
    assert out_bf_in.shape == (B, H * W, hidden_size)
    assert jnp.allclose(out_bf_in.astype(jnp.float32), ref, atol=3e-2, rtol=3e-2)

    print("KERNEL_OK")
</pallas_src>

<mosaic_0001>
module attributes {stable_mosaic.version = 11 : i64} {
  func.func @_proj_kernel(%arg0: i32, %arg1: i32, %arg2: memref<1x4x256xf32, #tpu.memory_space<vmem>>, %arg3: memref<4x32xf32, #tpu.memory_space<vmem>>, %arg4: memref<1x32xf32, #tpu.memory_space<vmem>>, %arg5: memref<1x256x32xf32, #tpu.memory_space<vmem>>) attributes {dimension_semantics = [#tpu.dimension_semantics<parallel>, #tpu.dimension_semantics<parallel>], iteration_bounds = array<i64: 2, 1>, scalar_prefetch = 0 : i64, scratch_operands = 0 : i64, tpu.core_type = #tpu.core_type<tc>, window_params = [{transform_indices = @transform_0, window_bounds = array<i64: 1, 4, 256>}, {pipeline_mode = #tpu.pipeline_mode<synchronous>, transform_indices = @transform_1, window_bounds = array<i64: 4, 32>}, {pipeline_mode = #tpu.pipeline_mode<synchronous>, transform_indices = @transform_2, window_bounds = array<i64: 1, 32>}, {transform_indices = @transform_3, window_bounds = array<i64: 1, 256, 32>}]} {
    %c0 = arith.constant 0 : index
    %c0_0 = arith.constant 0 : index
    %0 = vector.load %arg3[%c0, %c0_0] : memref<4x32xf32, #tpu.memory_space<vmem>>, vector<4x32xf32>
    %c0_1 = arith.constant 0 : index
    %c0_2 = arith.constant 0 : index
    %1 = vector.load %arg4[%c0_1, %c0_2] : memref<1x32xf32, #tpu.memory_space<vmem>>, vector<1x32xf32>
    %c0_3 = arith.constant 0 : index
    %c0_4 = arith.constant 0 : index
    %c0_5 = arith.constant 0 : index
    %2 = vector.load %arg2[%c0_3, %c0_4, %c0_5] : memref<1x4x256xf32, #tpu.memory_space<vmem>>, vector<1x4x256xf32>
    %3 = vector.shape_cast %2 : vector<1x4x256xf32> to vector<4x256xf32>
    %cst = arith.constant dense<0.000000e+00> : vector<256x32xf32>
    %4 = tpu.matmul %3, %0, %cst {dimension_numbers = #tpu.dot_dimension_numbers<[0], [0], [1], [1], [0, 1, 1, 1], [], []>} : vector<4x256xf32>, vector<4x32xf32>, vector<256x32xf32> -> vector<256x32xf32>
    %5 = vector.broadcast %1 : vector<1x32xf32> to vector<256x32xf32>
    %6 = arith.addf %4, %5 : vector<256x32xf32>
    %c0_6 = arith.constant 0 : index
    %c0_7 = arith.constant 0 : index
    %c0_8 = arith.constant 0 : index
    %7 = vector.load %arg5[%c0_6, %c0_7, %c0_8] : memref<1x256x32xf32, #tpu.memory_space<vmem>>, vector<1x256x32xf32>
    %8 = vector.shape_cast %7 : vector<1x256x32xf32> to vector<256x32xf32>
    %9 = vector.shape_cast %6 : vector<256x32xf32> to vector<1x256x32xf32>
    tpu.vector_store %arg5[%c0_6, %c0_7, %c0_8], %9 {strides = array<i32>} : memref<1x256x32xf32, #tpu.memory_space<vmem>>, vector<1x256x32xf32>,
    return
  }
  func.func @transform_0(%arg0: i32, %arg1: i32) -> (i32, i32, i32) {
    %c0_i32 = arith.constant 0 : i32
    %c0_i32_0 = arith.constant 0 : i32
    return %arg0, %c0_i32, %arg1 : i32, i32, i32
  }
  func.func @transform_1(%arg0: i32, %arg1: i32) -> (i32, i32) {
    %c0_i32 = arith.constant 0 : i32
    %c0_i32_0 = arith.constant 0 : i32
    %c0_i32_1 = arith.constant 0 : i32
    return %c0_i32, %c0_i32_0 : i32, i32
  }
  func.func @transform_2(%arg0: i32, %arg1: i32) -> (i32, i32) {
    %c0_i32 = arith.constant 0 : i32
    %c0_i32_0 = arith.constant 0 : i32
    %c0_i32_1 = arith.constant 0 : i32
    return %c0_i32, %c0_i32_0 : i32, i32
  }
  func.func @transform_3(%arg0: i32, %arg1: i32) -> (i32, i32, i32) {
    %c0_i32 = arith.constant 0 : i32
    %c0_i32_0 = arith.constant 0 : i32
    return %arg0, %arg1, %c0_i32 : i32, i32, i32
  }
}

</mosaic_0001>

<llo_original>
// kernel: tpu_custom_call.1
$region0: #{tpu_custom_call.1}
  #allocation0 [shape = 'u32[]', space=smem, size = 0x4, offset = 0x4, fixed_abs, tag = 'smem constant byte address 0x4 - core index']
  #allocation1 [shape = 'u32[144,128]{1,0:T(1,128)}', space=vmem, size = 0x12000, scoped, tag = 'internal scratch']
  %s0 = inlined_call_operand.hbm [shape: f32[2,4,256], index: 0, kind: input, shape index: {}]
  %s1 = inlined_call_operand.hbm [shape: f32[4,32], index: 1, kind: input, shape index: {}]
  %s2 = inlined_call_operand.vmem [shape: f32[1,32], index: 2, kind: input, shape index: {}]
  %s3 = inlined_call_operand.vmem [shape: f32[2,256,32], index: 3, kind: output, shape index: {}]
  %s4 = sld [smem:[#allocation0]]
  $region53: #{tpu_custom_call.1} parent=0
    _
  %s6 = ssub.s32 1, %s4
  %s7 = scalar_select 0, %s6, %s4
  $region1: #{tpu_custom_call.1} parent=0
    #allocation2 [shape = 'u8[8192]{0}', space=vmem, size = 0x2000, scoped, tag = 'input window, operand 0']
    #allocation3 [shape = 's32[2]{0}', space=sflag, size = 0x8, scoped, tag = 'scoped memory for tpu_custom_call.1']
    #allocation4 [shape = 'u8[2048]{0}', space=vmem, size = 0x800, scoped, tag = 'input window, operand 1, single buffered']
    #allocation5 [shape = 's32[1]{0}', space=sflag, size = 0x4, scoped, tag = 'scoped memory for tpu_custom_call.1']
    %8 = vsyncpa [#allocation3], 0
    %s9 = scalar_lea.sflag [#allocation3], 1
    %10 = vsyncpa %s9, 0
    %11 = vsyncpa [#allocation5], 0
    loop: start=0, step=1, limit=4
    $region2: #{tpu_custom_call.1} parent=1 // loop_pre_header
      _
    $region3: #{tpu_custom_call.1} parent=1 // loop_header
      %s13 = sphi 0, %s17
      %p14 = scmp.ge.s32.totalorder %s13, 4
      %s20 = sphi 0, %s32
      %s21 = sphi 0, %s28
      %s22 = sphi 0, %s20
      %s23 = sphi 0, %s21
      %s24 = sphi 0, %s22
      %s25 = sphi 0, %s23
      %s37 = sphi 0, %s39
      %s40 = sphi 0, %s37
      %s41 = sphi 0, %s40
      %s57 = sphi 0, %s41
      %s61 = sphi 0, %s61
      %s63 = sphi 0, %s61
      %s64 = sphi 0, %s63
      %s78 = sphi 0, %s64
      %s82 = sphi 0, %s82
      %s84 = sphi 0, %s82
      %s85 = sphi 0, %s84
      %s99 = sphi 0, %s85
      %s107 = sphi 0, %s109
      %s110 = sphi 0, %s107
      %s111 = sphi 0, %s110
      %s127 = sphi 0, %s111
    $region4: #{tpu_custom_call.1} parent=1 // loop_header_branch
      %16 = sbr.rel (%p14) target = $region8
    $region5: #{tpu_custom_call.1} parent=1 // loop_body
      %s18 = ssub.s32 %s13, 1
      %s19 = ssub.s32 %s13, 2
      %s26 = sadd.s32 1, %s21
      %p27 = scmp.ge.s32.totalorder %s26, 1
      %s28 = scalar_select %p27, 0, %s26
      %s29 = sadd.s32 1, %s20
      %s30 = scalar_select %p27, %s29, %s20
      %p31 = scmp.ge.s32.totalorder %s30, 2
      %s32 = scalar_select %p31, 0, %s30
      %s33 = ssub.s32 %s20, %s32
      %s34 = ssub.s32 %s21, %s28
      %s35 = sor.u32 %s33, %s34
      %p36 = scmp.eq.s32.totalorder %s35, 0
      %s38 = sadd.s32 %s37, 1
      %s39 = scalar_select %p36, %s37, %s38
      %p42 = pneg %p36
      %p43 = scmp.eq.s32.totalorder %s13, 1
      %p44 = por %p42, %p43
      %p45 = scmp.ne.s32.totalorder %s37, %s40
      %p46 = scmp.eq.s32.totalorder %s13, 0
      %p47 = por %p45, %p46
      %p48 = scmp.ne.s32.totalorder %s37, %s40
      %p49 = scmp.eq.s32.totalorder %s18, 1
      %p50 = por %p48, %p49
      %p51 = scmp.ne.s32.totalorder %s40, %s41
      %p52 = scmp.eq.s32.totalorder %s18, 0
      %p53 = por %p51, %p52
      %p54 = scmp.ne.s32.totalorder %s40, %s41
      %p55 = scmp.eq.s32.totalorder %s19, 1
      %p56 = por %p54, %p55
      %p58 = scmp.ne.s32.totalorder %s41, %s57
      %p59 = scmp.eq.s32.totalorder %s19, 0
      %p60 = por %p58, %p59
      %s62 = sadd.s32 %s61, 1
      %p65 = scmp.eq.s32.totalorder %s13, 1
      %p66 = scmp.ne.s32.totalorder %s61, %s63
      %p67 = scmp.eq.s32.totalorder %s13, 0
      %p68 = por %p66, %p67
      %p69 = scmp.ne.s32.totalorder %s61, %s63
      %p70 = scmp.eq.s32.totalorder %s18, 1
      %p71 = por %p69, %p70
      %p72 = scmp.ne.s32.totalorder %s63, %s64
      %p73 = scmp.eq.s32.totalorder %s18, 0
      %p74 = por %p72, %p73
      %p75 = scmp.ne.s32.totalorder %s63, %s64
      %p76 = scmp.eq.s32.totalorder %s19, 1
      %p77 = por %p75, %p76
      %p79 = scmp.ne.s32.totalorder %s64, %s78
      %p80 = scmp.eq.s32.totalorder %s19, 0
      %p81 = por %p79, %p80
      %s83 = sadd.s32 %s82, 1
      %p86 = scmp.eq.s32.totalorder %s13, 1
      %p87 = scmp.ne.s32.totalorder %s82, %s84
      %p88 = scmp.eq.s32.totalorder %s13, 0
      %p89 = por %p87, %p88
      %p90 = scmp.ne.s32.totalorder %s82, %s84
      %p91 = scmp.eq.s32.totalorder %s18, 1
      %p92 = por %p90, %p91
      %p93 = scmp.ne.s32.totalorder %s84, %s85
      %p94 = scmp.eq.s32.totalorder %s18, 0
      %p95 = por %p93, %p94
      %p96 = scmp.ne.s32.totalorder %s84, %s85
      %p97 = scmp.eq.s32.totalorder %s19, 1
      %p98 = por %p96, %p97
      %p100 = scmp.ne.s32.totalorder %s85, %s99
      %p101 = scmp.eq.s32.totalorder %s19, 0
      %p102 = por %p100, %p101
      %s103 = ssub.s32 %s20, %s32
      %s104 = ssub.s32 %s21, %s28
      %s105 = sor.u32 %s103, %s104
      %p106 = scmp.eq.s32.totalorder %s105, 0
      %s108 = sadd.s32 %s107, 1
      %s109 = scalar_select %p106, %s107, %s108
      %p112 = pneg %p106
      %p113 = scmp.eq.s32.totalorder %s13, 1
      %p114 = por %p112, %p113
      %p115 = scmp.ne.s32.totalorder %s107, %s110
      %p116 = scmp.eq.s32.totalorder %s13, 0
      %p117 = por %p115, %p116
      %p118 = scmp.ne.s32.totalorder %s107, %s110
      %p119 = scmp.eq.s32.totalorder %s18, 1
      %p120 = por %p118, %p119
      %p121 = scmp.ne.s32.totalorder %s110, %s111
      %p122 = scmp.eq.s32.totalorder %s18, 0
      %p123 = por %p121, %p122
      %p124 = scmp.ne.s32.totalorder %s110, %s111
      %p125 = scmp.eq.s32.totalorder %s19, 1
      %p126 = por %p124, %p125
      %p128 = scmp.ne.s32.totalorder %s111, %s127
      %p129 = scmp.eq.s32.totalorder %s19, 0
      %p130 = por %p128, %p129
      %p131 = scmp.le.s32.totalorder 1, %s13
      %p132 = scmp.lt.s32.totalorder %s13, 3
      %p133 = pnand %p131, %p132
      %p134 = pneg %p133
      // Predicated region
      $region9: #{tpu_custom_call.1} parent=5 // pred_check
        _
      $region10: #{tpu_custom_call.1} parent=5 // pred_check_branch
        %136 = sbr.rel (%p133) target = $region12
      $region11: #{tpu_custom_call.1} parent=5 // pred_region
        %s137 = ssub.s32 %s13, 1
        // Predicated region
        $region13: #{tpu_custom_call.1} parent=11 // pred_check
          %p138 = pneg %p74
        $region14: #{tpu_custom_call.1} parent=11 // pred_check_branch
          %140 = sbr.rel (%p138) target = $region16
        $region15: #{tpu_custom_call.1} parent=11 // pred_region
          %s142 = ssub.s32 64, 64
          %143 = vsyncadd [#allocation5], %s142
          %s145 = sshll.u32 [#allocation4], 4
          %s146 = int_to_ptr.vmem [resolvable:$true] %s145
          %148 = dma.hbm_to_vmem [thread:$0]  %s1, 64, %s146, [#allocation5]
        $region16: #{tpu_custom_call.1} parent=11 // pred_fallthru
          _
        // Predicated region
        $region17: #{tpu_custom_call.1} parent=11 // pred_check
          %p149 = pneg %p95
        $region18: #{tpu_custom_call.1} parent=11 // pred_check_branch
          %151 = sbr.rel (%p149) target = $region20
        $region19: #{tpu_custom_call.1} parent=11 // pred_region
          _
        $region20: #{tpu_custom_call.1} parent=11 // pred_fallthru
          _
      $region12: #{tpu_custom_call.1} parent=5 // pred_fallthru
        _
      %p152 = scmp.lt.s32.totalorder %s13, 2
      // Predicated region
      $region21: #{tpu_custom_call.1} parent=5 // pred_check
        %p153 = pneg %p152
      $region22: #{tpu_custom_call.1} parent=5 // pred_check_branch
        %155 = sbr.rel (%p153) target = $region24
      $region23: #{tpu_custom_call.1} parent=5 // pred_region
        // Predicated region
        $region25: #{tpu_custom_call.1} parent=23 // pred_check
          %p156 = pneg %p47
        $region26: #{tpu_custom_call.1} parent=23 // pred_check_branch
          %158 = sbr.rel (%p156) target = $region28
        $region27: #{tpu_custom_call.1} parent=23 // pred_region
          %s159 = sand.u32 %s37, 1
          %s160 = scalar_lea.sflag [#allocation3], %s159
          %s161 = sand.u32 %s37, 1
          %s162 = smul.addr %s161, 8
          %s163 = scalar_lea.vmem [#allocation2], %s162
          %s164 = smul.u32 2, %s21
          %s166 = ssub.s32 128, 128
          %167 = vsyncadd %s160, %s166
          %s168 = smul.addr %s20, 2
          %s169 = sadd.s32 %s164, %s168
          %s170 = smul.addr %s169, 64
          %s171 = scalar_lea.hbm %s0, %s170
          %s173 = sshll.u32 %s163, 4
          %s174 = int_to_ptr.vmem [resolvable:$true] %s173
          %176 = dma.hbm_to_vmem [thread:$0]  %s171, 128, %s174, %s160
        $region28: #{tpu_custom_call.1} parent=23 // pred_fallthru
          _
      $region24: #{tpu_custom_call.1} parent=5 // pred_fallthru
        _
      %p177 = scmp.le.s32.totalorder 1, %s13
      %p178 = scmp.lt.s32.totalorder %s13, 3
      %p179 = pnand %p177, %p178
      %p180 = pneg %p179
      // Predicated region
      $region29: #{tpu_custom_call.1} parent=5 // pred_check
        _
      $region30: #{tpu_custom_call.1} parent=5 // pred_check_branch
        %182 = sbr.rel (%p179) target = $region32
      $region31: #{tpu_custom_call.1} parent=5 // pred_region
        %s183 = ssub.s32 %s13, 1
        %s184 = sand.u32 %s40, 1
        %s185 = scalar_lea.sflag [#allocation3], %s184
        %s186 = sand.u32 %s40, 1
        %s187 = smul.addr %s186, 8
        %s188 = scalar_lea.vmem [#allocation2], %s187
        // Predicated region
        $region33: #{tpu_custom_call.1} parent=31 // pred_check
          %p189 = pneg %p53
        $region34: #{tpu_custom_call.1} parent=31 // pred_check_branch
          %191 = sbr.rel (%p189) target = $region36
        $region35: #{tpu_custom_call.1} parent=31 // pred_region
          %192 = dma.done %s185, 128
        $region36: #{tpu_custom_call.1} parent=31 // pred_fallthru
          _
        // Predicated region
        $region37: #{tpu_custom_call.1} parent=31 // pred_check
          %p193 = pneg %p74
        $region38: #{tpu_custom_call.1} parent=31 // pred_check_branch
          %195 = sbr.rel (%p193) target = $region40
        $region39: #{tpu_custom_call.1} parent=31 // pred_region
          %196 = dma.done [#allocation5], 64
        $region40: #{tpu_custom_call.1} parent=31 // pred_fallthru
          _
        %s197 = sand.u32 %s40, 1
        %s198 = scalar_lea.sflag [#allocation3], %s197
        %s199 = sand.u32 %s40, 1
        %s200 = smul.addr %s199, 8
        %s201 = scalar_lea.vmem [#allocation2], %s200
        %p202 = pneg %p53
        %p203 = pneg %p50
        %p204 = pneg %p74
        %p205 = pneg %p71
        %p206 = pneg %p95
        %p207 = pneg %p92
        %p208 = pneg %p123
        %p209 = pneg %p120
        %s210 = smul.u32 32, %s23
        %p211 = scmp.lt.s32.totalorder %s22, 1
        %s212 = scalar_select %p211, %s22, 1
        %p213 = scmp.lt.s32.totalorder %s210, 31
        %s214 = scalar_select %p213, %s210, 31
        %s215 = smul.addr %s212, 32
        %s216 = sadd.s32 %s214, %s215
        %s217 = smul.addr %s216, 8
        %s218 = scalar_lea.vmem %s3, %s217
        %s219 = smul.u32 2, %s23
        %s220 = smul.u32 32, %s23
        %p221 = scmp.lt.s32.totalorder %s22, 1
        %s222 = scalar_select %p221, %s22, 1
        %p223 = scmp.lt.s32.totalorder %s220, 31
        %s224 = scalar_select %p223, %s220, 31
        %s225 = smul.addr %s222, 32
        %s226 = sadd.s32 %s224, %s225
        %s227 = smul.addr %s226, 8
        %s228 = scalar_lea.vmem %s3, %s227
        %s229 = smul.u32 32, %s23
        %v230 = vld [vmem:[#allocation4] sm:$0xf]
        %v231 = vld [vmem:[%s2] sm:$0x1]
        %v232 = vld [vmem:[%s188] sm:$0xff]
        %v234 = vlaneseq
        %v235 = vshrl.u32 %v234, 7
        %v236 = vsub.s32 0, %v235
        %v237 = vrot.slane %v231, %v236
        %v240 = vcombine.high %v232, %v232
        %242 = vxpose.xlu0.b32.start [1/16] %v232, 128
        %243 = vxpose.xlu0.b32.cont [2/16] 0.0, 128
        %244 = vxpose.xlu0.b32.cont [3/16] 0.0, 128
        %245 = vxpose.xlu0.b32.cont [4/16] 0.0, 128
        %246 = vxpose.xlu0.b32.cont [5/16] 0.0, 128
        %247 = vxpose.xlu0.b32.cont [6/16] 0.0, 128
        %248 = vxpose.xlu0.b32.cont [7/16] 0.0, 128
        %249 = vxpose.xlu0.b32.cont [8/16] 0.0, 128
        %250 = vxpose.xlu0.b32.cont [9/16] 0.0, 128
        %251 = vxpose.xlu0.b32.cont [10/16] 0.0, 128
        %252 = vxpose.xlu0.b32.cont [11/16] 0.0, 128
        %253 = vxpose.xlu0.b32.cont [12/16] 0.0, 128
        %254 = vxpose.xlu0.b32.cont [13/16] 0.0, 128
        %255 = vxpose.xlu0.b32.cont [14/16] 0.0, 128
        %256 = vxpose.xlu0.b32.cont [15/16] 0.0, 128
        %257 = vxpose.xlu0.b32.end [16/16] 0.0, 128
        %v258 = vpop.trf.xlu0
        %v259 = vpop.trf.xlu0
        %v260 = vpop.trf.xlu0
        %v261 = vpop.trf.xlu0
        %v262 = vpop.trf.xlu0
        %v263 = vpop.trf.xlu0
        %v264 = vpop.trf.xlu0
        %v265 = vpop.trf.xlu0
        %v266 = vpop.trf.xlu0
        %v267 = vpop.trf.xlu0
        %v268 = vpop.trf.xlu0
        %v269 = vpop.trf.xlu0
        %v270 = vpop.trf.xlu0
        %v271 = vpop.trf.xlu0
        %v272 = vpop.trf.xlu0
        %v273 = vpop.trf.xlu0
        %274 = vxpose.xlu0.b32.start [1/16] %v240, 128
        %275 = vxpose.xlu0.b32.cont [2/16] 0.0, 128
        %276 = vxpose.xlu0.b32.cont [3/16] 0.0, 128
        %277 = vxpose.xlu0.b32.cont [4/16] 0.0, 128
        %278 = vxpose.xlu0.b32.cont [5/16] 0.0, 128
        %279 = vxpose.xlu0.b32.cont [6/16] 0.0, 128
        %280 = vxpose.xlu0.b32.cont [7/16] 0.0, 128
        %281 = vxpose.xlu0.b32.cont [8/16] 0.0, 128
        %282 = vxpose.xlu0.b32.cont [9/16] 0.0, 128
        %283 = vxpose.xlu0.b32.cont [10/16] 0.0, 128
        %284 = vxpose.xlu0.b32.cont [11/16] 0.0, 128
        %285 = vxpose.xlu0.b32.cont [12/16] 0.0, 128
        %286 = vxpose.xlu0.b32.cont [13/16] 0.0, 128
        %287 = vxpose.xlu0.b32.cont [14/16] 0.0, 128
        %288 = vxpose.xlu0.b32.cont [15/16] 0.0, 128
        %289 = vxpose.xlu0.b32.end [16/16] 0.0, 128
        %v290 = vpop.trf.xlu0
        %v291 = vpop.trf.xlu0
        %v292 = vpop.trf.xlu0
        %v293 = vpop.trf.xlu0
        %v294 = vpop.trf.xlu0
        %v295 = vpop.trf.xlu0
        %v296 = vpop.trf.xlu0
        %v297 = vpop.trf.xlu0
        %v298 = vpop.trf.xlu0
        %v299 = vpop.trf.xlu0
        %v300 = vpop.trf.xlu0
        %v301 = vpop.trf.xlu0
        %v302 = vpop.trf.xlu0
        %v303 = vpop.trf.xlu0
        %v304 = vpop.trf.xlu0
        %v305 = vpop.trf.xlu0
        %vm306 = vcmask 31744
        %v308 = vsel %vm306, %v258, 0
        %v311 = vsel %vm306, %v259, 0
        %v314 = vsel %vm306, %v260, 0
        %v317 = vsel %vm306, %v261, 0
        %v320 = vsel %vm306, %v262, 0
        %v323 = vsel %vm306, %v263, 0
        %v326 = vsel %vm306, %v264, 0
        %v329 = vsel %vm306, %v265, 0
        %v332 = vsel %vm306, %v266, 0
        %v335 = vsel %vm306, %v267, 0
        %v338 = vsel %vm306, %v268, 0
        %v341 = vsel %vm306, %v269, 0
        %v344 = vsel %vm306, %v270, 0
        %v347 = vsel %vm306, %v271, 0
        %v350 = vsel %vm306, %v272, 0
        %v353 = vsel %vm306, %v273, 0
        %v356 = vsel %vm306, %v290, 0
        %v359 = vsel %vm306, %v291, 0
        %v362 = vsel %vm306, %v292, 0
        %v365 = vsel %vm306, %v293, 0
        %v368 = vsel %vm306, %v294, 0
        %v371 = vsel %vm306, %v295, 0
        %v374 = vsel %vm306, %v296, 0
        %v377 = vsel %vm306, %v297, 0
        %v380 = vsel %vm306, %v298, 0
        %v383 = vsel %vm306, %v299, 0
        %v386 = vsel %vm306, %v300, 0
        %v389 = vsel %vm306, %v301, 0
        %v392 = vsel %vm306, %v302, 0
        %v395 = vsel %vm306, %v303, 0
        %v398 = vsel %vm306, %v304, 0
        %v401 = vsel %vm306, %v305, 0
        %vm403 = vcmask 1043456
        %v405 = vsel %vm403, %v230, 0
        %407 = vmatprep.subr.mxu0 0.0
        %408 = vmatpush1.msra.mxu0 %v405
        %409 = vmatprep.subr.mxu0 0.0
        %410 = vmatpush1.msra.mxu0 0.0
        %411 = vmatprep.subr.mxu0 0.0
        %412 = vmatpush1.msra.mxu0 0.0
        %413 = vmatprep.subr.mxu0 0.0
        %414 = vmatpush1.msra.mxu0 0.0
        %415 = vmatprep.subr.mxu0 0.0
        %416 = vmatpush1.msra.mxu0 0.0
        %417 = vmatprep.subr.mxu0 0.0
        %418 = vmatpush1.msra.mxu0 0.0
        %419 = vmatprep.subr.mxu0 0.0
        %420 = vmatpush1.msra.mxu0 0.0
        %421 = vmatprep.subr.mxu0 0.0
        %422 = vmatpush1.msra.mxu0 0.0
        %423 = vmatprep.subr.mxu0 0.0
        %424 = vmatpush1.msra.mxu0 0.0
        %425 = vmatprep.subr.mxu0 0.0
        %426 = vmatpush1.msra.mxu0 0.0
        %427 = vmatprep.subr.mxu0 0.0
        %428 = vmatpush1.msra.mxu0 0.0
        %429 = vmatprep.subr.mxu0 0.0
        %430 = vmatpush1.msra.mxu0 0.0
        %431 = vmatprep.subr.mxu0 0.0
        %432 = vmatpush1.msra.mxu0 0.0
        %433 = vmatprep.subr.mxu0 0.0
        %434 = vmatpush1.msra.mxu0 0.0
        %435 = vmatprep.subr.mxu0 0.0
        %436 = vmatpush1.msra.mxu0 0.0
        %437 = vmatprep.subr.mxu0 0.0
        %438 = vmatpush1.msra.mxu0 0.0
        %439 = vmatprep.subr.mxu0 0.0
        %440 = vmatpush1.msra.mxu0 0.0
        %441 = vmatprep.subr.mxu0 0.0
        %442 = vmatpush1.msra.mxu0 0.0
        %443 = vmatprep.subr.mxu0 0.0
        %444 = vmatpush1.msra.mxu0 0.0
        %445 = vmatprep.subr.mxu0 0.0
        %446 = vmatpush1.msra.mxu0 0.0
        %447 = vmatprep.subr.mxu0 0.0
        %448 = vmatpush1.msra.mxu0 0.0
        %449 = vmatprep.subr.mxu0 0.0
        %450 = vmatpush1.msra.mxu0 0.0
        %451 = vmatprep.subr.mxu0 0.0
        %452 = vmatpush1.msra.mxu0 0.0
        %453 = vmatprep.subr.mxu0 0.0
        %454 = vmatpush1.msra.mxu0 0.0
        %455 = vmatprep.subr.mxu0 0.0
        %456 = vmatpush1.msra.mxu0 0.0
        %457 = vmatprep.subr.mxu0 0.0
        %458 = vmatpush1.msra.mxu0 0.0
        %459 = vmatprep.subr.mxu0 0.0
        %460 = vmatpush1.msra.mxu0 0.0
        %461 = vmatprep.subr.mxu0 0.0
        %462 = vmatpush1.msra.mxu0 0.0
        %463 = vmatprep.subr.mxu0 0.0
        %464 = vmatpush1.msra.mxu0 0.0
        %465 = vmatprep.subr.mxu0 0.0
        %466 = vmatpush1.msra.mxu0 0.0
        %467 = vmatprep.subr.mxu0 0.0
        %468 = vmatpush1.msra.mxu0 0.0
        %469 = vmatprep.subr.mxu0 0.0
        %470 = vmatpush1.msra.mxu0 0.0
        %471 = vmatprep.mubr.f32.mxu0 0.0
        %472 = vmatmul.mubr.f32.gmra.mrb[0].mxu0 %v308
        %v473 = vpop.f32.mrb[0].mxu0
        %v474 = vadd.f32 %v237, %v473
        %v475 = vpop.f32.mrb[0].mxu0
        %476 = vmatprep.mubr.f32.mxu0 0.0
        %477 = vmatmul.mubr.f32.gmra.mrb[0].mxu0 %v311
        %v478 = vpop.f32.mrb[0].mxu0
        %v479 = vadd.f32 %v237, %v478
        %v480 = vpop.f32.mrb[0].mxu0
        %481 = vmatprep.mubr.f32.mxu0 0.0
        %482 = vmatmul.mubr.f32.gmra.mrb[0].mxu0 %v314
        %v483 = vpop.f32.mrb[0].mxu0
        %v484 = vadd.f32 %v237, %v483
        %v485 = vpop.f32.mrb[0].mxu0
        %486 = vmatprep.mubr.f32.mxu0 0.0
        %487 = vmatmul.mubr.f32.gmra.mrb[0].mxu0 %v317
        %v488 = vpop.f32.mrb[0].mxu0
        %v489 = vadd.f32 %v237, %v488
        %v490 = vpop.f32.mrb[0].mxu0
        %491 = vmatprep.mubr.f32.mxu0 0.0
        %492 = vmatmul.mubr.f32.gmra.mrb[0].mxu0 %v320
        %v493 = vpop.f32.mrb[0].mxu0
        %v494 = vadd.f32 %v237, %v493
        %v495 = vpop.f32.mrb[0].mxu0
        %496 = vmatprep.mubr.f32.mxu0 0.0
        %497 = vmatmul.mubr.f32.gmra.mrb[0].mxu0 %v323
        %v498 = vpop.f32.mrb[0].mxu0
        %v499 = vadd.f32 %v237, %v498
        %v500 = vpop.f32.mrb[0].mxu0
        %501 = vmatprep.mubr.f32.mxu0 0.0
        %502 = vmatmul.mubr.f32.gmra.mrb[0].mxu0 %v326
        %v503 = vpop.f32.mrb[0].mxu0
        %v504 = vadd.f32 %v237, %v503
        %v505 = vpop.f32.mrb[0].mxu0
        %506 = vmatprep.mubr.f32.mxu0 0.0
        %507 = vmatmul.mubr.f32.gmra.mrb[0].mxu0 %v329
        %v508 = vpop.f32.mrb[0].mxu0
        %v509 = vadd.f32 %v237, %v508
        %v510 = vpop.f32.mrb[0].mxu0
        %511 = vmatprep.mubr.f32.mxu0 0.0
        %512 = vmatmul.mubr.f32.gmra.mrb[0].mxu0 %v332
        %v513 = vpop.f32.mrb[0].mxu0
        %v514 = vadd.f32 %v237, %v513
        %v515 = vpop.f32.mrb[0].mxu0
        %516 = vmatprep.mubr.f32.mxu0 0.0
        %517 = vmatmul.mubr.f32.gmra.mrb[0].mxu0 %v335
        %v518 = vpop.f32.mrb[0].mxu0
        %v519 = vadd.f32 %v237, %v518
        %v520 = vpop.f32.mrb[0].mxu0
        %521 = vmatprep.mubr.f32.mxu0 0.0
        %522 = vmatmul.mubr.f32.gmra.mrb[0].mxu0 %v338
        %v523 = vpop.f32.mrb[0].mxu0
        %v524 = vadd.f32 %v237, %v523
        %v525 = vpop.f32.mrb[0].mxu0
        %526 = vmatprep.mubr.f32.mxu0 0.0
        %527 = vmatmul.mubr.f32.gmra.mrb[0].mxu0 %v341
        %v528 = vpop.f32.mrb[0].mxu0
        %v529 = vadd.f32 %v237, %v528
        %v530 = vpop.f32.mrb[0].mxu0
        %531 = vmatprep.mubr.f32.mxu0 0.0
        %532 = vmatmul.mubr.f32.gmra.mrb[0].mxu0 %v344
        %v533 = vpop.f32.mrb[0].mxu0
        %v534 = vadd.f32 %v237, %v533
        %v535 = vpop.f32.mrb[0].mxu0
        %536 = vmatprep.mubr.f32.mxu0 0.0
        %537 = vmatmul.mubr.f32.gmra.mrb[0].mxu0 %v347
        %v538 = vpop.f32.mrb[0].mxu0
        %v539 = vadd.f32 %v237, %v538
        %v540 = vpop.f32.mrb[0].mxu0
        %541 = vmatprep.mubr.f32.mxu0 0.0
        %542 = vmatmul.mubr.f32.gmra.mrb[0].mxu0 %v350
        %v543 = vpop.f32.mrb[0].mxu0
        %v544 = vadd.f32 %v237, %v543
        %v545 = vpop.f32.mrb[0].mxu0
        %546 = vmatprep.mubr.f32.mxu0 0.0
        %547 = vmatmul.mubr.f32.gmra.mrb[0].mxu0 %v353
        %v548 = vpop.f32.mrb[0].mxu0
        %v549 = vadd.f32 %v237, %v548
        %v550 = vpop.f32.mrb[0].mxu0
        %551 = vmatprep.mubr.f32.mxu0 0.0
        %552 = vmatmul.mubr.f32.gmra.mrb[0].mxu0 %v356
        %v553 = vpop.f32.mrb[0].mxu0
        %v554 = vadd.f32 %v237, %v553
        %v555 = vpop.f32.mrb[0].mxu0
        %556 = vmatprep.mubr.f32.mxu0 0.0
        %557 = vmatmul.mubr.f32.gmra.mrb[0].mxu0 %v359
        %v558 = vpop.f32.mrb[0].mxu0
        %v559 = vadd.f32 %v237, %v558
        %v560 = vpop.f32.mrb[0].mxu0
        %561 = vmatprep.mubr.f32.mxu0 0.0
        %562 = vmatmul.mubr.f32.gmra.mrb[0].mxu0 %v362
        %v563 = vpop.f32.mrb[0].mxu0
        %v564 = vadd.f32 %v237, %v563
        %v565 = vpop.f32.mrb[0].mxu0
        %566 = vmatprep.mubr.f32.mxu0 0.0
        %567 = vmatmul.mubr.f32.gmra.mrb[0].mxu0 %v365
        %v568 = vpop.f32.mrb[0].mxu0
        %v569 = vadd.f32 %v237, %v568
        %v570 = vpop.f32.mrb[0].mxu0
        %571 = vmatprep.mubr.f32.mxu0 0.0
        %572 = vmatmul.mubr.f32.gmra.mrb[0].mxu0 %v368
        %v573 = vpop.f32.mrb[0].mxu0
        %v574 = vadd.f32 %v237, %v573
        %v575 = vpop.f32.mrb[0].mxu0
        %576 = vmatprep.mubr.f32.mxu0 0.0
        %577 = vmatmul.mubr.f32.gmra.mrb[0].mxu0 %v371
        %v578 = vpop.f32.mrb[0].mxu0
        %v579 = vadd.f32 %v237, %v578
        %v580 = vpop.f32.mrb[0].mxu0
        %581 = vmatprep.mubr.f32.mxu0 0.0
        %582 = vmatmul.mubr.f32.gmra.mrb[0].mxu0 %v374
        %v583 = vpop.f32.mrb[0].mxu0
        %v584 = vadd.f32 %v237, %v583
        %v585 = vpop.f32.mrb[0].mxu0
        %586 = vmatprep.mubr.f32.mxu0 0.0
        %587 = vmatmul.mubr.f32.gmra.mrb[0].mxu0 %v377
        %v588 = vpop.f32.mrb[0].mxu0
        %v589 = vadd.f32 %v237, %v588
        %v590 = vpop.f32.mrb[0].mxu0
        %591 = vmatprep.mubr.f32.mxu0 0.0
        %592 = vmatmul.mubr.f32.gmra.mrb[0].mxu0 %v380
        %v593 = vpop.f32.mrb[0].mxu0
        %v594 = vadd.f32 %v237, %v593
        %v595 = vpop.f32.mrb[0].mxu0
        %596 = vmatprep.mubr.f32.mxu0 0.0
        %597 = vmatmul.mubr.f32.gmra.mrb[0].mxu0 %v383
        %v598 = vpop.f32.mrb[0].mxu0
        %v599 = vadd.f32 %v237, %v598
        %v600 = vpop.f32.mrb[0].mxu0
        %601 = vmatprep.mubr.f32.mxu0 0.0
        %602 = vmatmul.mubr.f32.gmra.mrb[0].mxu0 %v386
        %v603 = vpop.f32.mrb[0].mxu0
        %v604 = vadd.f32 %v237, %v603
        %v605 = vpop.f32.mrb[0].mxu0
        %606 = vmatprep.mubr.f32.mxu0 0.0
        %607 = vmatmul.mubr.f32.gmra.mrb[0].mxu0 %v389
        %v608 = vpop.f32.mrb[0].mxu0
        %v609 = vadd.f32 %v237, %v608
        %v610 = vpop.f32.mrb[0].mxu0
        %611 = vmatprep.mubr.f32.mxu0 0.0
        %612 = vmatmul.mubr.f32.gmra.mrb[0].mxu0 %v392
        %v613 = vpop.f32.mrb[0].mxu0
        %v614 = vadd.f32 %v237, %v613
        %v615 = vpop.f32.mrb[0].mxu0
        %616 = vmatprep.mubr.f32.mxu0 0.0
        %617 = vmatmul.mubr.f32.gmra.mrb[0].mxu0 %v395
        %v618 = vpop.f32.mrb[0].mxu0
        %v619 = vadd.f32 %v237, %v618
        %v620 = vpop.f32.mrb[0].mxu0
        %621 = vmatprep.mubr.f32.mxu0 0.0
        %622 = vmatmul.mubr.f32.gmra.mrb[0].mxu0 %v398
        %v623 = vpop.f32.mrb[0].mxu0
        %v624 = vadd.f32 %v237, %v623
        %v625 = vpop.f32.mrb[0].mxu0
        %626 = vmatprep.mubr.f32.mxu0 0.0
        %627 = vmatmul.mubr.f32.gmra.mrb[0].mxu0 %v401
        %v628 = vpop.f32.mrb[0].mxu0
        %v629 = vadd.f32 %v237, %v628
        %v630 = vpop.f32.mrb[0].mxu0
        %631 = vdwg.mxu0
        %vm632 = vcmask 261120
        %633 = vst.msk [vmem:[%s228] sm:$0xff] %vm632, %v474
        %634 = vst.msk [vmem:[%s228 + $0x8] sm:$0xff] %vm632, %v479
        %635 = vst.msk [vmem:[%s228 + $0x10] sm:$0xff] %vm632, %v484
        %636 = vst.msk [vmem:[%s228 + $0x18] sm:$0xff] %vm632, %v489
        %637 = vst.msk [vmem:[%s228 + $0x20] sm:$0xff] %vm632, %v494
        %638 = vst.msk [vmem:[%s228 + $0x28] sm:$0xff] %vm632, %v499
        %639 = vst.msk [vmem:[%s228 + $0x30] sm:$0xff] %vm632, %v504
        %640 = vst.msk [vmem:[%s228 + $0x38] sm:$0xff] %vm632, %v509
        %641 = vst.msk [vmem:[%s228 + $0x40] sm:$0xff] %vm632, %v514
        %642 = vst.msk [vmem:[%s228 + $0x48] sm:$0xff] %vm632, %v519
        %643 = vst.msk [vmem:[%s228 + $0x50] sm:$0xff] %vm632, %v524
        %644 = vst.msk [vmem:[%s228 + $0x58] sm:$0xff] %vm632, %v529
        %645 = vst.msk [vmem:[%s228 + $0x60] sm:$0xff] %vm632, %v534
        %646 = vst.msk [vmem:[%s228 + $0x68] sm:$0xff] %vm632, %v539
        %647 = vst.msk [vmem:[%s228 + $0x70] sm:$0xff] %vm632, %v544
        %648 = vst.msk [vmem:[%s228 + $0x78] sm:$0xff] %vm632, %v549
        %649 = vst.msk [vmem:[%s228 + $0x80] sm:$0xff] %vm632, %v554
        %650 = vst.msk [vmem:[%s228 + $0x88] sm:$0xff] %vm632, %v559
        %651 = vst.msk [vmem:[%s228 + $0x90] sm:$0xff] %vm632, %v564
        %652 = vst.msk [vmem:[%s228 + $0x98] sm:$0xff] %vm632, %v569
        %653 = vst.msk [vmem:[%s228 + $0xa0] sm:$0xff] %vm632, %v574
        %654 = vst.msk [vmem:[%s228 + $0xa8] sm:$0xff] %vm632, %v579
        %655 = vst.msk [vmem:[%s228 + $0xb0] sm:$0xff] %vm632, %v584
        %656 = vst.msk [vmem:[%s228 + $0xb8] sm:$0xff] %vm632, %v589
        %657 = vst.msk [vmem:[%s228 + $0xc0] sm:$0xff] %vm632, %v594
        %658 = vst.msk [vmem:[%s228 + $0xc8] sm:$0xff] %vm632, %v599
        %659 = vst.msk [vmem:[%s228 + $0xd0] sm:$0xff] %vm632, %v604
        %660 = vst.msk [vmem:[%s228 + $0xd8] sm:$0xff] %vm632, %v609
        %661 = vst.msk [vmem:[%s228 + $0xe0] sm:$0xff] %vm632, %v614
        %662 = vst.msk [vmem:[%s228 + $0xe8] sm:$0xff] %vm632, %v619
        %663 = vst.msk [vmem:[%s228 + $0xf0] sm:$0xff] %vm632, %v624
        %664 = vst.msk [vmem:[%s228 + $0xf8] sm:$0xff] %vm632, %v629
        %s665 = smul.u32 32, %s23
        %p666 = scmp.lt.s32.totalorder %s22, 1
        %s667 = scalar_select %p666, %s22, 1
        %p668 = scmp.lt.s32.totalorder %s665, 31
        %s669 = scalar_select %p668, %s665, 31
        %s670 = smul.addr %s667, 32
        %s671 = sadd.s32 %s669, %s670
        %s672 = smul.addr %s671, 8
        %s673 = scalar_lea.vmem %s3, %s672
        // Predicated region
        $region41: #{tpu_custom_call.1} parent=31 // pred_check
          %p674 = pneg %p120
        $region42: #{tpu_custom_call.1} parent=31 // pred_check_branch
          %676 = sbr.rel (%p674) target = $region44
        $region43: #{tpu_custom_call.1} parent=31 // pred_region
          %s677 = smul.u32 32, %s23
        $region44: #{tpu_custom_call.1} parent=31 // pred_fallthru
          _
      $region32: #{tpu_custom_call.1} parent=5 // pred_fallthru
        _
      %p678 = scmp.le.s32.totalorder 2, %s13
      // Predicated region
      $region45: #{tpu_custom_call.1} parent=5 // pred_check
        %p679 = pneg %p678
      $region46: #{tpu_custom_call.1} parent=5 // pred_check_branch
        %681 = sbr.rel (%p679) target = $region48
      $region47: #{tpu_custom_call.1} parent=5 // pred_region
        %s682 = ssub.s32 %s13, 2
        // Predicated region
        $region49: #{tpu_custom_call.1} parent=47 // pred_check
          %p683 = pneg %p126
        $region50: #{tpu_custom_call.1} parent=47 // pred_check_branch
          %685 = sbr.rel (%p683) target = $region52
        $region51: #{tpu_custom_call.1} parent=47 // pred_region
          %s686 = smul.u32 32, %s25
          %p687 = scmp.lt.s32.totalorder %s24, 1
          %s688 = scalar_select %p687, %s24, 1
          %p689 = scmp.lt.s32.totalorder %s686, 31
          %s690 = scalar_select %p689, %s686, 31
          %s691 = smul.addr %s688, 32
          %s692 = sadd.s32 %s690, %s691
          %s693 = smul.addr %s692, 8
          %s694 = scalar_lea.vmem %s3, %s693
        $region52: #{tpu_custom_call.1} parent=47 // pred_fallthru
          _
      $region48: #{tpu_custom_call.1} parent=5 // pred_fallthru
        _
    $region6: #{tpu_custom_call.1} parent=1 // loop_footer
      %s17 = sadd.s32 1, %s13
    $region7: #{tpu_custom_call.1} parent=1 // loop_footer_branch
      %12 = sbr.rel target = $region3
    $region8: #{tpu_custom_call.1} parent=1 // loop_exit
      _
    %695 = vsyncpa [#allocation3], 1
    %s696 = scalar_lea.sflag [#allocation3], 1
    %697 = vsyncpa %s696, 1
    %698 = vsyncpa [#allocation5], 1

</llo_original>
